<compile_context>
chip_gen: v6e
topology: v6e:2x2x1
jax: 0.10.0
libtpu: 0.0.40
codegen_flags: <defaults>
</compile_context>

<pallas_src>
import functools

import jax
import jax.numpy as jnp
from jax.experimental import pallas as pl
from jax.experimental.pallas import tpu as pltpu


def _round_up(x, m):
    return ((x + m - 1) // m) * m


def _node_tiling(n):
    """Returns (padded_n, row_tile, k_tile) with padded_n % tiles == 0."""
    if n <= 512:
        np_pad = _round_up(max(n, 8), 128)
        return np_pad, np_pad, np_pad        # single tile per axis
    np_pad = _round_up(n, 512)
    return np_pad, 256, 512                  # 256-aligned rows (v6e/v7x MXU)


def _pad2(m, rows, cols, dtype):
    m = m.astype(dtype)
    return jnp.pad(m, ((0, rows - m.shape[0]), (0, cols - m.shape[1])))


def sage_conv_kernel(a_ref, xn_ref, xs_ref, wl_ref, wr_ref, b_ref,
                     o_ref, acc_ref, *, apply_relu):
    """One (row-tile, neighbor-tile) grid step of a SAGEConv layer."""
    k = pl.program_id(1)

    @pl.when(k == 0)
    def _init():
        acc_ref[...] = jnp.zeros_like(acc_ref)

    # Accumulate mean-aggregated neighbor features: [TM, TK] @ [TK, F_in].
    acc_ref[...] += jnp.dot(a_ref[...], xn_ref[...],
                            preferred_element_type=jnp.float32)

    @pl.when(k == pl.num_programs(1) - 1)
    def _epilogue():
        agg = acc_ref[...].astype(jnp.bfloat16)
        out = jnp.dot(agg, wl_ref[...], preferred_element_type=jnp.float32)
        out = out + jnp.dot(xs_ref[...], wr_ref[...],
                            preferred_element_type=jnp.float32)
        out = out + b_ref[...]                      # f32 bias, added once
        if apply_relu:
            out = jnp.maximum(out, 0.0)
        o_ref[...] = out.astype(o_ref.dtype)


def sage_conv(a, x, w_l, w_r, b, *, apply_relu, out_dtype, tm, tk):
    """out = (A @ x) @ W_l + x @ W_r + b   (optionally ReLU'd).

    a: [Np, Np] bf16 (row-normalized, padded), x: [Np, F_in] bf16 (padded),
    w_l/w_r: [F_in, F_out] bf16 (pre-transposed, padded), b: [1, F_out] f32.
    """
    np_pad = a.shape[0]
    f_in = x.shape[1]
    f_out = w_l.shape[1]
    grid = (np_pad // tm, np_pad // tk)
    kernel = functools.partial(sage_conv_kernel, apply_relu=apply_relu)
    return pl.pallas_call(
        kernel,
        out_shape=jax.ShapeDtypeStruct((np_pad, f_out), out_dtype),
        grid_spec=pltpu.PrefetchScalarGridSpec(
            num_scalar_prefetch=0,
            grid=grid,
            in_specs=[
                pl.BlockSpec((tm, tk), lambda i, k: (i, k)),        # A tile
                pl.BlockSpec((tk, f_in), lambda i, k: (k, 0)),      # x neigh
                pl.BlockSpec((tm, f_in), lambda i, k: (i, 0)),      # x self
                pl.BlockSpec((f_in, f_out), lambda i, k: (0, 0)),   # W_l
                pl.BlockSpec((f_in, f_out), lambda i, k: (0, 0)),   # W_r
                pl.BlockSpec((1, f_out), lambda i, k: (0, 0)),      # bias
            ],
            out_specs=pl.BlockSpec((tm, f_out), lambda i, k: (i, 0)),
            scratch_shapes=[pltpu.VMEM((tm, f_in), jnp.float32)],   # agg acc
        ),
        compiler_params=pltpu.CompilerParams(
            dimension_semantics=("parallel", "arbitrary")),
    )(a, x, x, w_l, w_r, b)


def build_normalized_adjacency(edge_index, num_nodes):
    """Dense A with A[i, j] = 1/deg_in(i) for each edge j -> i."""
    src, dst = edge_index[0], edge_index[1]
    a = jnp.zeros((num_nodes, num_nodes), jnp.float32)
    a = a.at[dst, src].add(1.0)
    deg = a.sum(axis=1, keepdims=True)
    return a / jnp.maximum(deg, 1.0)   # isolated nodes aggregate to 0 (PyG)


def init_sage_params(key, in_channels, out_channels):
    k1, k2, k3 = jax.random.split(key, 3)
    scale = 1.0 / jnp.sqrt(jnp.float32(in_channels))
    w_l = jax.random.uniform(k1, (in_channels, out_channels), jnp.float32, -scale, scale)
    w_r = jax.random.uniform(k2, (in_channels, out_channels), jnp.float32, -scale, scale)
    b = jax.random.uniform(k3, (1, out_channels), jnp.float32, -scale, scale)
    return w_l, w_r, b


def graphsage_forward(params, x, edge_index):
    n, f_in = x.shape
    (w_l1, w_r1, b1), (w_l2, w_r2, b2) = params
    hidden = w_l1.shape[1]
    f_out = w_l2.shape[1]

    np_pad, tm, tk = _node_tiling(n)
    f_in_p = _round_up(f_in, 128)
    hid_p = _round_up(hidden, 128)
    f_out_p = _round_up(f_out, 128)

    # Pad + cast once on the host-side JAX graph (zero padding keeps math exact).
    a = build_normalized_adjacency(edge_index, n)
    a_p = _pad2(a, np_pad, np_pad, jnp.bfloat16)
    x_p = _pad2(x, np_pad, f_in_p, jnp.bfloat16)

    wl1 = _pad2(w_l1, f_in_p, hid_p, jnp.bfloat16)
    wr1 = _pad2(w_r1, f_in_p, hid_p, jnp.bfloat16)
    b1p = _pad2(b1, 1, hid_p, jnp.float32)
    wl2 = _pad2(w_l2, hid_p, f_out_p, jnp.bfloat16)
    wr2 = _pad2(w_r2, hid_p, f_out_p, jnp.bfloat16)
    b2p = _pad2(b2, 1, f_out_p, jnp.float32)

    # conv1 + ReLU; keep h in bf16 so it feeds layer-2 MXU matmuls directly.
    h = sage_conv(a_p, x_p, wl1, wr1, b1p,
                  apply_relu=True, out_dtype=jnp.bfloat16, tm=tm, tk=tk)
    # F.dropout(p=0.5) in eval mode -> identity.
    out = sage_conv(a_p, h, wl2, wr2, b2p,
                    apply_relu=False, out_dtype=jnp.float32, tm=tm, tk=tk)
    return out[:n, :f_out]


def graphsage_reference(params, x, edge_index):
    """Pure-JAX f32 reference for correctness checking."""
    n = x.shape[0]
    a = build_normalized_adjacency(edge_index, n)
    (w_l1, w_r1, b1), (w_l2, w_r2, b2) = params
    h = (a @ x) @ w_l1 + x @ w_r1 + b1
    h = jnp.maximum(h, 0.0)
    return (a @ h) @ w_l2 + h @ w_r2 + b2


if __name__ == "__main__":
    key = jax.random.PRNGKey(0)
    num_nodes, num_edges = 16, 48
    in_channels, hidden_channels, out_channels = 32, 128, 8

    kx, ksrc, kdst, kp1, kp2 = jax.random.split(key, 5)
    x = jax.random.normal(kx, (num_nodes, in_channels), jnp.float32)
    src = jax.random.randint(ksrc, (num_edges,), 0, num_nodes)
    dst = jax.random.randint(kdst, (num_edges,), 0, num_nodes)
    edge_index = jnp.stack([src, dst], axis=0)  # [2, E]

    params = (
        init_sage_params(kp1, in_channels, hidden_channels),
        init_sage_params(kp2, hidden_channels, out_channels),
    )

    out = graphsage_forward(params, x, edge_index)
    out = jax.block_until_ready(out)

    ref = graphsage_reference(params, x, edge_index)
    assert out.shape == (num_nodes, out_channels)
    # bf16 MXU inputs (f32 accumulation) -> loosened tolerance vs f32 reference.
    assert jnp.allclose(out, ref, atol=5e-2, rtol=5e-2)

    print("KERNEL_OK")
</pallas_src>

<mosaic_0001>
module attributes {stable_mosaic.version = 11 : i64} {
  func.func @sage_conv_kernel(%arg0: i32, %arg1: i32, %arg2: memref<128x128xbf16, #tpu.memory_space<vmem>>, %arg3: memref<128x128xbf16, #tpu.memory_space<vmem>>, %arg4: memref<128x128xbf16, #tpu.memory_space<vmem>>, %arg5: memref<128x128xbf16, #tpu.memory_space<vmem>>, %arg6: memref<128x128xbf16, #tpu.memory_space<vmem>>, %arg7: memref<1x128xf32, #tpu.memory_space<vmem>>, %arg8: memref<128x128xbf16, #tpu.memory_space<vmem>>, %arg9: memref<128x128xf32, #tpu.memory_space<vmem>>) attributes {dimension_semantics = [#tpu.dimension_semantics<parallel>, #tpu.dimension_semantics<arbitrary>], iteration_bounds = array<i64: 1, 1>, scalar_prefetch = 0 : i64, scratch_operands = 1 : i64, tpu.core_type = #tpu.core_type<tc>, window_params = [{transform_indices = @transform_0, window_bounds = array<i64: 128, 128>}, {transform_indices = @transform_1, window_bounds = array<i64: 128, 128>}, {transform_indices = @transform_2, window_bounds = array<i64: 128, 128>}, {pipeline_mode = #tpu.pipeline_mode<synchronous>, transform_indices = @transform_3, window_bounds = array<i64: 128, 128>}, {pipeline_mode = #tpu.pipeline_mode<synchronous>, transform_indices = @transform_4, window_bounds = array<i64: 128, 128>}, {pipeline_mode = #tpu.pipeline_mode<synchronous>, transform_indices = @transform_5, window_bounds = array<i64: 1, 128>}, {transform_indices = @transform_6, window_bounds = array<i64: 128, 128>}]} {
    %c0_i32 = arith.constant 0 : i32
    %0 = arith.cmpi eq, %arg1, %c0_i32 : i32
    %1 = arith.extui %0 : i1 to i32
    %c0_i32_0 = arith.constant 0 : i32
    %2 = arith.cmpi ne, %1, %c0_i32_0 : i32
    scf.if %2 {
      %cst_10 = arith.constant 0.000000e+00 : f32
      %12 = vector.broadcast %cst_10 : f32 to vector<128x128xf32>
      %c0_11 = arith.constant 0 : index
      %c0_12 = arith.constant 0 : index
      %13 = vector.load %arg9[%c0_11, %c0_12] : memref<128x128xf32, #tpu.memory_space<vmem>>, vector<128x128xf32>
      tpu.vector_store %arg9[%c0_11, %c0_12], %12 {strides = array<i32>} : memref<128x128xf32, #tpu.memory_space<vmem>>, vector<128x128xf32>,
    } else {
    }
    %c0 = arith.constant 0 : index
    %c0_1 = arith.constant 0 : index
    %3 = vector.load %arg9[%c0, %c0_1] : memref<128x128xf32, #tpu.memory_space<vmem>>, vector<128x128xf32>
    %c0_2 = arith.constant 0 : index
    %c0_3 = arith.constant 0 : index
    %4 = vector.load %arg2[%c0_2, %c0_3] : memref<128x128xbf16, #tpu.memory_space<vmem>>, vector<128x128xbf16>
    %c0_4 = arith.constant 0 : index
    %c0_5 = arith.constant 0 : index
    %5 = vector.load %arg3[%c0_4, %c0_5] : memref<128x128xbf16, #tpu.memory_space<vmem>>, vector<128x128xbf16>
    %cst = arith.constant dense<0.000000e+00> : vector<128x128xf32>
    %6 = tpu.matmul %4, %5, %cst {dimension_numbers = #tpu.dot_dimension_numbers<[1], [0], [0], [1], [0, 0, 1, 1], [], []>} : vector<128x128xbf16>, vector<128x128xbf16>, vector<128x128xf32> -> vector<128x128xf32>
    %7 = arith.addf %3, %6 : vector<128x128xf32>
    %c0_6 = arith.constant 0 : index
    %c0_7 = arith.constant 0 : index
    %8 = vector.load %arg9[%c0_6, %c0_7] : memref<128x128xf32, #tpu.memory_space<vmem>>, vector<128x128xf32>
    tpu.vector_store %arg9[%c0_6, %c0_7], %7 {strides = array<i32>} : memref<128x128xf32, #tpu.memory_space<vmem>>, vector<128x128xf32>,
    %c0_i32_8 = arith.constant 0 : i32
    %9 = arith.cmpi eq, %arg1, %c0_i32_8 : i32
    %10 = arith.extui %9 : i1 to i32
    %c0_i32_9 = arith.constant 0 : i32
    %11 = arith.cmpi ne, %10, %c0_i32_9 : i32
    scf.if %11 {
      %c0_10 = arith.constant 0 : index
      %c0_11 = arith.constant 0 : index
      %12 = vector.load %arg9[%c0_10, %c0_11] : memref<128x128xf32, #tpu.memory_space<vmem>>, vector<128x128xf32>
      %13 = arith.truncf %12 : vector<128x128xf32> to vector<128x128xbf16>
      %c0_12 = arith.constant 0 : index
      %c0_13 = arith.constant 0 : index
      %14 = vector.load %arg5[%c0_12, %c0_13] : memref<128x128xbf16, #tpu.memory_space<vmem>>, vector<128x128xbf16>
      %cst_14 = arith.constant dense<0.000000e+00> : vector<128x128xf32>
      %15 = tpu.matmul %13, %14, %cst_14 {dimension_numbers = #tpu.dot_dimension_numbers<[1], [0], [0], [1], [0, 0, 1, 1], [], []>} : vector<128x128xbf16>, vector<128x128xbf16>, vector<128x128xf32> -> vector<128x128xf32>
      %c0_15 = arith.constant 0 : index
      %c0_16 = arith.constant 0 : index
      %16 = vector.load %arg4[%c0_15, %c0_16] : memref<128x128xbf16, #tpu.memory_space<vmem>>, vector<128x128xbf16>
      %c0_17 = arith.constant 0 : index
      %c0_18 = arith.constant 0 : index
      %17 = vector.load %arg6[%c0_17, %c0_18] : memref<128x128xbf16, #tpu.memory_space<vmem>>, vector<128x128xbf16>
      %cst_19 = arith.constant dense<0.000000e+00> : vector<128x128xf32>
      %18 = tpu.matmul %16, %17, %cst_19 {dimension_numbers = #tpu.dot_dimension_numbers<[1], [0], [0], [1], [0, 0, 1, 1], [], []>} : vector<128x128xbf16>, vector<128x128xbf16>, vector<128x128xf32> -> vector<128x128xf32>
      %19 = arith.addf %15, %18 : vector<128x128xf32>
      %c0_20 = arith.constant 0 : index
      %c0_21 = arith.constant 0 : index
      %20 = vector.load %arg7[%c0_20, %c0_21] : memref<1x128xf32, #tpu.memory_space<vmem>>, vector<1x128xf32>
      %21 = vector.broadcast %20 : vector<1x128xf32> to vector<128x128xf32>
      %22 = arith.addf %19, %21 : vector<128x128xf32>
      %cst_22 = arith.constant 0.000000e+00 : f32
      %23 = vector.broadcast %cst_22 : f32 to vector<128x128xf32>
      %24 = arith.maximumf %22, %23 : vector<128x128xf32>
      %25 = arith.truncf %24 : vector<128x128xf32> to vector<128x128xbf16>
      %c0_23 = arith.constant 0 : index
      %c0_24 = arith.constant 0 : index
      %26 = vector.load %arg8[%c0_23, %c0_24] : memref<128x128xbf16, #tpu.memory_space<vmem>>, vector<128x128xbf16>
      tpu.vector_store %arg8[%c0_23, %c0_24], %25 {strides = array<i32>} : memref<128x128xbf16, #tpu.memory_space<vmem>>, vector<128x128xbf16>,
    } else {
    }
    return
  }
  func.func @transform_0(%arg0: i32, %arg1: i32) -> (i32, i32) {
    %c0_i32 = arith.constant 0 : i32
    return %arg0, %arg1 : i32, i32
  }
  func.func @transform_1(%arg0: i32, %arg1: i32) -> (i32, i32) {
    %c0_i32 = arith.constant 0 : i32
    %c0_i32_0 = arith.constant 0 : i32
    return %arg1, %c0_i32 : i32, i32
  }
  func.func @transform_2(%arg0: i32, %arg1: i32) -> (i32, i32) {
    %c0_i32 = arith.constant 0 : i32
    %c0_i32_0 = arith.constant 0 : i32
    return %arg0, %c0_i32 : i32, i32
  }
  func.func @transform_3(%arg0: i32, %arg1: i32) -> (i32, i32) {
    %c0_i32 = arith.constant 0 : i32
    %c0_i32_0 = arith.constant 0 : i32
    %c0_i32_1 = arith.constant 0 : i32
    return %c0_i32, %c0_i32_0 : i32, i32
  }
  func.func @transform_4(%arg0: i32, %arg1: i32) -> (i32, i32) {
    %c0_i32 = arith.constant 0 : i32
    %c0_i32_0 = arith.constant 0 : i32
    %c0_i32_1 = arith.constant 0 : i32
    return %c0_i32, %c0_i32_0 : i32, i32
  }
  func.func @transform_5(%arg0: i32, %arg1: i32) -> (i32, i32) {
    %c0_i32 = arith.constant 0 : i32
    %c0_i32_0 = arith.constant 0 : i32
    %c0_i32_1 = arith.constant 0 : i32
    return %c0_i32, %c0_i32_0 : i32, i32
  }
  func.func @transform_6(%arg0: i32, %arg1: i32) -> (i32, i32) {
    %c0_i32 = arith.constant 0 : i32
    %c0_i32_0 = arith.constant 0 : i32
    return %arg0, %c0_i32 : i32, i32
  }
}

</mosaic_0001>

<llo_original>
// kernel: tpu_custom_call.1
$region0: #{tpu_custom_call.1}
  #allocation0 [shape = 'u32[]', space=smem, size = 0x4, offset = 0x4, fixed_abs, tag = 'smem constant byte address 0x4 - core index']
  #allocation1 [shape = 'u32[144,128]{1,0:T(1,128)}', space=vmem, size = 0x12000, scoped, tag = 'internal scratch']
  #allocation2 [shape = 'f32[128,128]{1,0:T(8,128)}', space=vmem, size = 0x10000, scoped, tag = 'scratch operand']
  %s0 = inlined_call_operand.hbm [shape: bf16[128,128], index: 0, kind: input, shape index: {}]
  %s1 = inlined_call_operand.hbm [shape: bf16[128,128], index: 1, kind: input, shape index: {}]
  %s2 = inlined_call_operand.hbm [shape: bf16[128,128], index: 2, kind: input, shape index: {}]
  %s3 = inlined_call_operand.hbm [shape: bf16[128,128], index: 3, kind: input, shape index: {}]
  %s4 = inlined_call_operand.hbm [shape: bf16[128,128], index: 4, kind: input, shape index: {}]
  %s5 = inlined_call_operand.vmem [shape: f32[1,128], index: 5, kind: input, shape index: {}]
  %s6 = inlined_call_operand.hbm [shape: bf16[128,128], index: 6, kind: output, shape index: {}]
  %s7 = sld [smem:[#allocation0]]
  $region62: #{tpu_custom_call.1} parent=0
    _
  %s9 = ssub.s32 1, %s7
  %s10 = scalar_select 0, %s9, %s7
  $region1: #{tpu_custom_call.1} parent=0
    #allocation3 [shape = 'u8[32768]{0}', space=vmem, size = 0x8000, scoped, tag = 'input window, operand 0, single buffered']
    #allocation4 [shape = 's32[1]{0}', space=sflag, size = 0x4, scoped, tag = 'scoped memory for tpu_custom_call.1']
    #allocation5 [shape = 's32[1]{0}', space=sflag, size = 0x4, scoped, tag = 'scoped memory for tpu_custom_call.1']
    #allocation6 [shape = 'u8[32768]{0}', space=vmem, size = 0x8000, scoped, tag = 'input window, operand 1, single buffered']
    #allocation7 [shape = 's32[1]{0}', space=sflag, size = 0x4, scoped, tag = 'scoped memory for tpu_custom_call.1']
    #allocation8 [shape = 'u8[32768]{0}', space=vmem, size = 0x8000, scoped, tag = 'input window, operand 2, single buffered']
    #allocation9 [shape = 'u8[32768]{0}', space=vmem, size = 0x8000, scoped, tag = 'input window, operand 3, single buffered']
    #allocation10 [shape = 's32[1]{0}', space=sflag, size = 0x4, scoped, tag = 'scoped memory for tpu_custom_call.1']
    #allocation11 [shape = 'u8[32768]{0}', space=vmem, size = 0x8000, scoped, tag = 'input window, operand 4, single buffered']
    #allocation12 [shape = 'u8[32768]{0}', space=vmem, size = 0x8000, scoped, tag = 'output window, operand 0, single buffered']
    %11 = vsyncpa [#allocation4], 0
    %12 = vsyncpa [#allocation7], 0
    %13 = vsyncpa [#allocation10], 0
    %14 = vsyncpa [#allocation5], 0
    // Predicated region
    $region2: #{tpu_custom_call.1} parent=1 // pred_check
      _
    $region3: #{tpu_custom_call.1} parent=1 // pred_check_branch
      %16 = sbr.rel (0) target = $region5
    $region4: #{tpu_custom_call.1} parent=1 // pred_region
      %s18 = ssub.s32 1024, 1024
      %19 = vsyncadd [#allocation4], %s18
      %s20 = sshll.u32 [#allocation3], 4
      %s21 = int_to_ptr.vmem [resolvable:$true] %s20
      %26 = dma.hbm_to_vmem [thread:$0]  %s0, 1024, %s21, [#allocation4], 64, 64, 4
    $region5: #{tpu_custom_call.1} parent=1 // pred_fallthru
      _
    // Predicated region
    $region6: #{tpu_custom_call.1} parent=1 // pred_check
      _
    $region7: #{tpu_custom_call.1} parent=1 // pred_check_branch
      %28 = sbr.rel (0) target = $region9
    $region8: #{tpu_custom_call.1} parent=1 // pred_region
      %s30 = ssub.s32 1024, 1024
      %31 = vsyncadd [#allocation7], %s30
      %s32 = sshll.u32 [#allocation6], 4
      %s33 = int_to_ptr.vmem [resolvable:$true] %s32
      %38 = dma.hbm_to_vmem [thread:$0]  %s1, 1024, %s33, [#allocation7], 64, 64, 4
    $region9: #{tpu_custom_call.1} parent=1 // pred_fallthru
      _
    // Predicated region
    $region10: #{tpu_custom_call.1} parent=1 // pred_check
      _
    $region11: #{tpu_custom_call.1} parent=1 // pred_check_branch
      %40 = sbr.rel (0) target = $region13
    $region12: #{tpu_custom_call.1} parent=1 // pred_region
      %s42 = ssub.s32 1024, 1024
      %43 = vsyncadd [#allocation7], %s42
      %s44 = sshll.u32 [#allocation8], 4
      %s45 = int_to_ptr.vmem [resolvable:$true] %s44
      %50 = dma.hbm_to_vmem [thread:$0]  %s2, 1024, %s45, [#allocation7], 64, 64, 4
    $region13: #{tpu_custom_call.1} parent=1 // pred_fallthru
      _
    // Predicated region
    $region14: #{tpu_custom_call.1} parent=1 // pred_check
      _
    $region15: #{tpu_custom_call.1} parent=1 // pred_check_branch
      %52 = sbr.rel (0) target = $region17
    $region16: #{tpu_custom_call.1} parent=1 // pred_region
      %s54 = ssub.s32 1024, 1024
      %55 = vsyncadd [#allocation10], %s54
      %s56 = sshll.u32 [#allocation9], 4
      %s57 = int_to_ptr.vmem [resolvable:$true] %s56
      %62 = dma.hbm_to_vmem [thread:$0]  %s3, 1024, %s57, [#allocation10], 64, 64, 4
    $region17: #{tpu_custom_call.1} parent=1 // pred_fallthru
      _
    // Predicated region
    $region18: #{tpu_custom_call.1} parent=1 // pred_check
      _
    $region19: #{tpu_custom_call.1} parent=1 // pred_check_branch
      %64 = sbr.rel (0) target = $region21
    $region20: #{tpu_custom_call.1} parent=1 // pred_region
      %s66 = ssub.s32 1024, 1024
      %67 = vsyncadd [#allocation10], %s66
      %s68 = sshll.u32 [#allocation11], 4
      %s69 = int_to_ptr.vmem [resolvable:$true] %s68
      %74 = dma.hbm_to_vmem [thread:$0]  %s4, 1024, %s69, [#allocation10], 64, 64, 4
    $region21: #{tpu_custom_call.1} parent=1 // pred_fallthru
      _
    // Predicated region
    $region22: #{tpu_custom_call.1} parent=1 // pred_check
      _
    $region23: #{tpu_custom_call.1} parent=1 // pred_check_branch
      %76 = sbr.rel (0) target = $region25
    $region24: #{tpu_custom_call.1} parent=1 // pred_region
      _
    $region25: #{tpu_custom_call.1} parent=1 // pred_fallthru
      _
    // Predicated region
    $region26: #{tpu_custom_call.1} parent=1 // pred_check
      _
    $region27: #{tpu_custom_call.1} parent=1 // pred_check_branch
      %78 = sbr.rel (0) target = $region29
    $region28: #{tpu_custom_call.1} parent=1 // pred_region
      %79 = dma.done [#allocation4], 1024
    $region29: #{tpu_custom_call.1} parent=1 // pred_fallthru
      _
    // Predicated region
    $region30: #{tpu_custom_call.1} parent=1 // pred_check
      _
    $region31: #{tpu_custom_call.1} parent=1 // pred_check_branch
      %81 = sbr.rel (0) target = $region33
    $region32: #{tpu_custom_call.1} parent=1 // pred_region
      %82 = dma.done [#allocation7], 1024
    $region33: #{tpu_custom_call.1} parent=1 // pred_fallthru
      _
    // Predicated region
    $region34: #{tpu_custom_call.1} parent=1 // pred_check
      _
    $region35: #{tpu_custom_call.1} parent=1 // pred_check_branch
      %84 = sbr.rel (0) target = $region37
    $region36: #{tpu_custom_call.1} parent=1 // pred_region
      %85 = dma.done [#allocation7], 1024
    $region37: #{tpu_custom_call.1} parent=1 // pred_fallthru
      _
    // Predicated region
    $region38: #{tpu_custom_call.1} parent=1 // pred_check
      _
    $region39: #{tpu_custom_call.1} parent=1 // pred_check_branch
      %87 = sbr.rel (0) target = $region41
    $region40: #{tpu_custom_call.1} parent=1 // pred_region
      %88 = dma.done [#allocation10], 1024
    $region41: #{tpu_custom_call.1} parent=1 // pred_fallthru
      _
    // Predicated region
    $region42: #{tpu_custom_call.1} parent=1 // pred_check
      _
    $region43: #{tpu_custom_call.1} parent=1 // pred_check_branch
      %90 = sbr.rel (0) target = $region45
    $region44: #{tpu_custom_call.1} parent=1 // pred_region
      %91 = dma.done [#allocation10], 1024
    $region45: #{tpu_custom_call.1} parent=1 // pred_fallthru
      _
    %p93 = scmp.eq.s32.totalorder 0, 0
    // Predicated region
    $region46: #{tpu_custom_call.1} parent=1 // pred_check
      %p94 = pneg %p93
    $region47: #{tpu_custom_call.1} parent=1 // pred_check_branch
      %96 = sbr.rel (%p94) target = $region49
    $region48: #{tpu_custom_call.1} parent=1 // pred_region
      %97 = vst [vmem:[#allocation2] sm:$0xff] 0.0
      %98 = vst [vmem:[#allocation2 + $0x8] sm:$0xff] 0.0
      %99 = vst [vmem:[#allocation2 + $0x10] sm:$0xff] 0.0
      %100 = vst [vmem:[#allocation2 + $0x18] sm:$0xff] 0.0
      %101 = vst [vmem:[#allocation2 + $0x20] sm:$0xff] 0.0
      %102 = vst [vmem:[#allocation2 + $0x28] sm:$0xff] 0.0
      %103 = vst [vmem:[#allocation2 + $0x30] sm:$0xff] 0.0
      %104 = vst [vmem:[#allocation2 + $0x38] sm:$0xff] 0.0
      %105 = vst [vmem:[#allocation2 + $0x40] sm:$0xff] 0.0
      %106 = vst [vmem:[#allocation2 + $0x48] sm:$0xff] 0.0
      %107 = vst [vmem:[#allocation2 + $0x50] sm:$0xff] 0.0
      %108 = vst [vmem:[#allocation2 + $0x58] sm:$0xff] 0.0
      %109 = vst [vmem:[#allocation2 + $0x60] sm:$0xff] 0.0
      %110 = vst [vmem:[#allocation2 + $0x68] sm:$0xff] 0.0
      %111 = vst [vmem:[#allocation2 + $0x70] sm:$0xff] 0.0
      %112 = vst [vmem:[#allocation2 + $0x78] sm:$0xff] 0.0
    $region49: #{tpu_custom_call.1} parent=1 // pred_fallthru
      _
    %v113 = vld [vmem:[#allocation2] sm:$0xff]
    %v114 = vld [vmem:[#allocation2 + $0x8] sm:$0xff]
    %v115 = vld [vmem:[#allocation2 + $0x10] sm:$0xff]
    %v116 = vld [vmem:[#allocation2 + $0x18] sm:$0xff]
    %v117 = vld [vmem:[#allocation2 + $0x20] sm:$0xff]
    %v118 = vld [vmem:[#allocation2 + $0x28] sm:$0xff]
    %v119 = vld [vmem:[#allocation2 + $0x30] sm:$0xff]
    %v120 = vld [vmem:[#allocation2 + $0x38] sm:$0xff]
    %v121 = vld [vmem:[#allocation2 + $0x40] sm:$0xff]
    %v122 = vld [vmem:[#allocation2 + $0x48] sm:$0xff]
    %v123 = vld [vmem:[#allocation2 + $0x50] sm:$0xff]
    %v124 = vld [vmem:[#allocation2 + $0x58] sm:$0xff]
    %v125 = vld [vmem:[#allocation2 + $0x60] sm:$0xff]
    %v126 = vld [vmem:[#allocation2 + $0x68] sm:$0xff]
    %v127 = vld [vmem:[#allocation2 + $0x70] sm:$0xff]
    %v128 = vld [vmem:[#allocation2 + $0x78] sm:$0xff]
    %v129 = vld [vmem:[#allocation3] sm:$0xf]
    %v130 = vld [vmem:[#allocation3 + $0x4] sm:$0xf]
    %v131 = vld [vmem:[#allocation3 + $0x8] sm:$0xf]
    %v132 = vld [vmem:[#allocation3 + $0xc] sm:$0xf]
    %v133 = vld [vmem:[#allocation3 + $0x10] sm:$0xf]
    %v134 = vld [vmem:[#allocation3 + $0x14] sm:$0xf]
    %v135 = vld [vmem:[#allocation3 + $0x18] sm:$0xf]
    %v136 = vld [vmem:[#allocation3 + $0x1c] sm:$0xf]
    %v137 = vld [vmem:[#allocation3 + $0x20] sm:$0xf]
    %v138 = vld [vmem:[#allocation3 + $0x24] sm:$0xf]
    %v139 = vld [vmem:[#allocation3 + $0x28] sm:$0xf]
    %v140 = vld [vmem:[#allocation3 + $0x2c] sm:$0xf]
    %v141 = vld [vmem:[#allocation3 + $0x30] sm:$0xf]
    %v142 = vld [vmem:[#allocation3 + $0x34] sm:$0xf]
    %v143 = vld [vmem:[#allocation3 + $0x38] sm:$0xf]
    %v144 = vld [vmem:[#allocation3 + $0x3c] sm:$0xf]
    %v145 = vld [vmem:[#allocation6] sm:$0xf]
    %v146 = vld [vmem:[#allocation6 + $0x4] sm:$0xf]
    %v147 = vld [vmem:[#allocation6 + $0x8] sm:$0xf]
    %v148 = vld [vmem:[#allocation6 + $0xc] sm:$0xf]
    %v149 = vld [vmem:[#allocation6 + $0x10] sm:$0xf]
    %v150 = vld [vmem:[#allocation6 + $0x14] sm:$0xf]
    %v151 = vld [vmem:[#allocation6 + $0x18] sm:$0xf]
    %v152 = vld [vmem:[#allocation6 + $0x1c] sm:$0xf]
    %v153 = vld [vmem:[#allocation6 + $0x20] sm:$0xf]
    %v154 = vld [vmem:[#allocation6 + $0x24] sm:$0xf]
    %v155 = vld [vmem:[#allocation6 + $0x28] sm:$0xf]
    %v156 = vld [vmem:[#allocation6 + $0x2c] sm:$0xf]
    %v157 = vld [vmem:[#allocation6 + $0x30] sm:$0xf]
    %v158 = vld [vmem:[#allocation6 + $0x34] sm:$0xf]
    %v159 = vld [vmem:[#allocation6 + $0x38] sm:$0xf]
    %v160 = vld [vmem:[#allocation6 + $0x3c] sm:$0xf]
    %v177 = vunpack.c.l.b16 %v129
    %v178 = vunpack.c.l.b16 %v130
    %v179 = vunpack.c.l.b16 %v131
    %v180 = vunpack.c.l.b16 %v132
    %v181 = vunpack.c.l.b16 %v133
    %v182 = vunpack.c.l.b16 %v134
    %v183 = vunpack.c.l.b16 %v135
    %v184 = vunpack.c.l.b16 %v136
    %v185 = vunpack.c.l.b16 %v137
    %v186 = vunpack.c.l.b16 %v138
    %v187 = vunpack.c.l.b16 %v139
    %v188 = vunpack.c.l.b16 %v140
    %v189 = vunpack.c.l.b16 %v141
    %v190 = vunpack.c.l.b16 %v142
    %v191 = vunpack.c.l.b16 %v143
    %v192 = vunpack.c.l.b16 %v144
    %v193 = vpack.c.b16 %v178, %v177
    %v194 = vpack.c.b16 %v180, %v179
    %v195 = vpack.c.b16 %v182, %v181
    %v196 = vpack.c.b16 %v184, %v183
    %v197 = vpack.c.b16 %v186, %v185
    %v198 = vpack.c.b16 %v188, %v187
    %v199 = vpack.c.b16 %v190, %v189
    %v200 = vpack.c.b16 %v192, %v191
    %v225 = vunpack.c.l.b16 %v145
    %v226 = vunpack.c.l.b16 %v146
    %v227 = vunpack.c.l.b16 %v147
    %v228 = vunpack.c.l.b16 %v148
    %v229 = vunpack.c.l.b16 %v149
    %v230 = vunpack.c.l.b16 %v150
    %v231 = vunpack.c.l.b16 %v151
    %v232 = vunpack.c.l.b16 %v152
    %v233 = vunpack.c.l.b16 %v153
    %v234 = vunpack.c.l.b16 %v154
    %v235 = vunpack.c.l.b16 %v155
    %v236 = vunpack.c.l.b16 %v156
    %v237 = vunpack.c.l.b16 %v157
    %v238 = vunpack.c.l.b16 %v158
    %v239 = vunpack.c.l.b16 %v159
    %v240 = vunpack.c.l.b16 %v160
    %v241 = vpack.c.b16 %v226, %v225
    %v242 = vpack.c.b16 %v228, %v227
    %v243 = vpack.c.b16 %v230, %v229
    %v244 = vpack.c.b16 %v232, %v231
    %v245 = vpack.c.b16 %v234, %v233
    %v246 = vpack.c.b16 %v236, %v235
    %v247 = vpack.c.b16 %v238, %v237
    %v248 = vpack.c.b16 %v240, %v239
    %257 = vmatprep.subr.bf16.mxu0 0
    %258 = vmatpush1.bf16.msra.mxu0 %v248
    %259 = vmatprep.subr.bf16.mxu0 0
    %260 = vmatpush1.bf16.msra.mxu0 %v247
    %261 = vmatprep.subr.bf16.mxu0 0
    %262 = vmatpush1.bf16.msra.mxu0 %v246
    %263 = vmatprep.subr.bf16.mxu0 0
    %264 = vmatpush1.bf16.msra.mxu0 %v245
    %265 = vmatprep.subr.bf16.mxu0 0
    %266 = vmatpush1.bf16.msra.mxu0 %v244
    %267 = vmatprep.subr.bf16.mxu0 0
    %268 = vmatpush1.bf16.msra.mxu0 %v243
    %269 = vmatprep.subr.bf16.mxu0 0
    %270 = vmatpush1.bf16.msra.mxu0 %v242
    %271 = vmatprep.subr.bf16.mxu0 0
    %272 = vmatpush1.bf16.msra.mxu0 %v241
    %273 = vmatprep.subr.bf16.mxu0 0
    %274 = vmatpush2.bf16.msra.mxu0 0
    %275 = vmatprep.subr.bf16.mxu0 0
    %276 = vmatpush2.bf16.msra.mxu0 0
    %277 = vmatprep.subr.bf16.mxu0 0
    %278 = vmatpush2.bf16.msra.mxu0 0
    %279 = vmatprep.subr.bf16.mxu0 0
    %280 = vmatpush2.bf16.msra.mxu0 0
    %281 = vmatprep.subr.bf16.mxu0 0
    %282 = vmatpush2.bf16.msra.mxu0 0
    %283 = vmatprep.subr.bf16.mxu0 0
    %284 = vmatpush2.bf16.msra.mxu0 0
    %285 = vmatprep.subr.bf16.mxu0 0
    %286 = vmatpush2.bf16.msra.mxu0 0
    %287 = vmatprep.subr.bf16.mxu0 0
    %288 = vmatpush2.bf16.msra.mxu0 0
    %289 = vmatprep.mubr.bf16.mxu0 0
    %290 = vmatmul.mubr.bf16.gmra.mxu0 %v193
    %v291 = vpop.f32.mrf.mxu0
    %v292 = vadd.f32 0.0, %v291
    %v293 = vpop.f32.mrf.mxu0
    %v294 = vpop.f32.mrf.mxu0
    %v295 = vadd.f32 0.0, %v294
    %v296 = vpop.f32.mrf.mxu0
    %297 = vmatprep.mubr.bf16.mxu0 0
    %298 = vmatmul.mubr.bf16.gmra.mxu0 %v194
    %v299 = vpop.f32.mrf.mxu0
    %v300 = vadd.f32 0.0, %v299
    %v301 = vpop.f32.mrf.mxu0
    %v302 = vpop.f32.mrf.mxu0
    %v303 = vadd.f32 0.0, %v302
    %v304 = vpop.f32.mrf.mxu0
    %305 = vmatprep.mubr.bf16.mxu0 0
    %306 = vmatmul.mubr.bf16.gmra.mxu0 %v195
    %v307 = vpop.f32.mrf.mxu0
    %v308 = vadd.f32 0.0, %v307
    %v309 = vpop.f32.mrf.mxu0
    %v310 = vpop.f32.mrf.mxu0
    %v311 = vadd.f32 0.0, %v310
    %v312 = vpop.f32.mrf.mxu0
    %313 = vmatprep.mubr.bf16.mxu0 0
    %314 = vmatmul.mubr.bf16.gmra.mxu0 %v196
    %v315 = vpop.f32.mrf.mxu0
    %v316 = vadd.f32 0.0, %v315
    %v317 = vpop.f32.mrf.mxu0
    %v318 = vpop.f32.mrf.mxu0
    %v319 = vadd.f32 0.0, %v318
    %v320 = vpop.f32.mrf.mxu0
    %321 = vmatprep.mubr.bf16.mxu0 0
    %322 = vmatmul.mubr.bf16.gmra.mxu0 %v197
    %v323 = vpop.f32.mrf.mxu0
    %v324 = vadd.f32 0.0, %v323
    %v325 = vpop.f32.mrf.mxu0
    %v326 = vpop.f32.mrf.mxu0
    %v327 = vadd.f32 0.0, %v326
    %v328 = vpop.f32.mrf.mxu0
    %329 = vmatprep.mubr.bf16.mxu0 0
    %330 = vmatmul.mubr.bf16.gmra.mxu0 %v198
    %v331 = vpop.f32.mrf.mxu0
    %v332 = vadd.f32 0.0, %v331
    %v333 = vpop.f32.mrf.mxu0
    %v334 = vpop.f32.mrf.mxu0
    %v335 = vadd.f32 0.0, %v334
    %v336 = vpop.f32.mrf.mxu0
    %337 = vmatprep.mubr.bf16.mxu0 0
    %338 = vmatmul.mubr.bf16.gmra.mxu0 %v199
    %v339 = vpop.f32.mrf.mxu0
    %v340 = vadd.f32 0.0, %v339
    %v341 = vpop.f32.mrf.mxu0
    %v342 = vpop.f32.mrf.mxu0
    %v343 = vadd.f32 0.0, %v342
    %v344 = vpop.f32.mrf.mxu0
    %345 = vmatprep.mubr.bf16.mxu0 0
    %346 = vmatmul.mubr.bf16.gmra.mxu0 %v200
    %v347 = vpop.f32.mrf.mxu0
    %v348 = vadd.f32 0.0, %v347
    %v349 = vpop.f32.mrf.mxu0
    %v350 = vpop.f32.mrf.mxu0
    %v351 = vadd.f32 0.0, %v350
    %v352 = vpop.f32.mrf.mxu0
    %353 = vdwg.mxu0
    %v354 = vadd.f32 %v113, %v292
    %v355 = vadd.f32 %v114, %v295
    %v356 = vadd.f32 %v115, %v300
    %v357 = vadd.f32 %v116, %v303
    %v358 = vadd.f32 %v117, %v308
    %v359 = vadd.f32 %v118, %v311
    %v360 = vadd.f32 %v119, %v316
    %v361 = vadd.f32 %v120, %v319
    %v362 = vadd.f32 %v121, %v324
    %v363 = vadd.f32 %v122, %v327
    %v364 = vadd.f32 %v123, %v332
    %v365 = vadd.f32 %v124, %v335
    %v366 = vadd.f32 %v125, %v340
    %v367 = vadd.f32 %v126, %v343
    %v368 = vadd.f32 %v127, %v348
    %v369 = vadd.f32 %v128, %v351
    %370 = vst [vmem:[#allocation2] sm:$0xff] %v354
    %371 = vst [vmem:[#allocation2 + $0x8] sm:$0xff] %v355
    %372 = vst [vmem:[#allocation2 + $0x10] sm:$0xff] %v356
    %373 = vst [vmem:[#allocation2 + $0x18] sm:$0xff] %v357
    %374 = vst [vmem:[#allocation2 + $0x20] sm:$0xff] %v358
    %375 = vst [vmem:[#allocation2 + $0x28] sm:$0xff] %v359
    %376 = vst [vmem:[#allocation2 + $0x30] sm:$0xff] %v360
    %377 = vst [vmem:[#allocation2 + $0x38] sm:$0xff] %v361
    %378 = vst [vmem:[#allocation2 + $0x40] sm:$0xff] %v362
    %379 = vst [vmem:[#allocation2 + $0x48] sm:$0xff] %v363
    %380 = vst [vmem:[#allocation2 + $0x50] sm:$0xff] %v364
    %381 = vst [vmem:[#allocation2 + $0x58] sm:$0xff] %v365
    %382 = vst [vmem:[#allocation2 + $0x60] sm:$0xff] %v366
    %383 = vst [vmem:[#allocation2 + $0x68] sm:$0xff] %v367
    %384 = vst [vmem:[#allocation2 + $0x70] sm:$0xff] %v368
    %385 = vst [vmem:[#allocation2 + $0x78] sm:$0xff] %v369
    // Predicated region
    $region50: #{tpu_custom_call.1} parent=1 // pred_check
      %p386 = pneg %p93
    $region51: #{tpu_custom_call.1} parent=1 // pred_check_branch
      %388 = sbr.rel (%p386) target = $region53
    $region52: #{tpu_custom_call.1} parent=1 // pred_region
      %v389 = vld [vmem:[#allocation2] sm:$0xff]
      %v390 = vld [vmem:[#allocation2 + $0x8] sm:$0xff]
      %v391 = vld [vmem:[#allocation2 + $0x10] sm:$0xff]
      %v392 = vld [vmem:[#allocation2 + $0x18] sm:$0xff]
      %v393 = vld [vmem:[#allocation2 + $0x20] sm:$0xff]
      %v394 = vld [vmem:[#allocation2 + $0x28] sm:$0xff]
      %v395 = vld [vmem:[#allocation2 + $0x30] sm:$0xff]
      %v396 = vld [vmem:[#allocation2 + $0x38] sm:$0xff]
      %v397 = vld [vmem:[#allocation2 + $0x40] sm:$0xff]
      %v398 = vld [vmem:[#allocation2 + $0x48] sm:$0xff]
      %v399 = vld [vmem:[#allocation2 + $0x50] sm:$0xff]
      %v400 = vld [vmem:[#allocation2 + $0x58] sm:$0xff]
      %v401 = vld [vmem:[#allocation2 + $0x60] sm:$0xff]
      %v402 = vld [vmem:[#allocation2 + $0x68] sm:$0xff]
      %v403 = vld [vmem:[#allocation2 + $0x70] sm:$0xff]
      %v404 = vld [vmem:[#allocation2 + $0x78] sm:$0xff]
      %v405 = vpack.c.bf16 %v390, %v389
      %v406 = vpack.c.bf16 %v392, %v391
      %v407 = vpack.c.bf16 %v394, %v393
      %v408 = vpack.c.bf16 %v396, %v395
      %v409 = vpack.c.bf16 %v398, %v397
      %v410 = vpack.c.bf16 %v400, %v399
      %v411 = vpack.c.bf16 %v402, %v401
      %v412 = vpack.c.bf16 %v404, %v403
      %v413 = vld [vmem:[#allocation9] sm:$0xf]
      %v414 = vld [vmem:[#allocation9 + $0x4] sm:$0xf]
      %v415 = vld [vmem:[#allocation9 + $0x8] sm:$0xf]
      %v416 = vld [vmem:[#allocation9 + $0xc] sm:$0xf]
      %v417 = vld [vmem:[#allocation9 + $0x10] sm:$0xf]
      %v418 = vld [vmem:[#allocation9 + $0x14] sm:$0xf]
      %v419 = vld [vmem:[#allocation9 + $0x18] sm:$0xf]
      %v420 = vld [vmem:[#allocation9 + $0x1c] sm:$0xf]
      %v421 = vld [vmem:[#allocation9 + $0x20] sm:$0xf]
      %v422 = vld [vmem:[#allocation9 + $0x24] sm:$0xf]
      %v423 = vld [vmem:[#allocation9 + $0x28] sm:$0xf]
      %v424 = vld [vmem:[#allocation9 + $0x2c] sm:$0xf]
      %v425 = vld [vmem:[#allocation9 + $0x30] sm:$0xf]
      %v426 = vld [vmem:[#allocation9 + $0x34] sm:$0xf]
      %v427 = vld [vmem:[#allocation9 + $0x38] sm:$0xf]
      %v428 = vld [vmem:[#allocation9 + $0x3c] sm:$0xf]
      %v429 = vld [vmem:[#allocation8] sm:$0xf]
      %v430 = vld [vmem:[#allocation8 + $0x4] sm:$0xf]
      %v431 = vld [vmem:[#allocation8 + $0x8] sm:$0xf]
      %v432 = vld [vmem:[#allocation8 + $0xc] sm:$0xf]
      %v433 = vld [vmem:[#allocation8 + $0x10] sm:$0xf]
      %v434 = vld [vmem:[#allocation8 + $0x14] sm:$0xf]
      %v435 = vld [vmem:[#allocation8 + $0x18] sm:$0xf]
      %v436 = vld [vmem:[#allocation8 + $0x1c] sm:$0xf]
      %v437 = vld [vmem:[#allocation8 + $0x20] sm:$0xf]
      %v438 = vld [vmem:[#allocation8 + $0x24] sm:$0xf]
      %v439 = vld [vmem:[#allocation8 + $0x28] sm:$0xf]
      %v440 = vld [vmem:[#allocation8 + $0x2c] sm:$0xf]
      %v441 = vld [vmem:[#allocation8 + $0x30] sm:$0xf]
      %v442 = vld [vmem:[#allocation8 + $0x34] sm:$0xf]
      %v443 = vld [vmem:[#allocation8 + $0x38] sm:$0xf]
      %v444 = vld [vmem:[#allocation8 + $0x3c] sm:$0xf]
      %v445 = vld [vmem:[#allocation11] sm:$0xf]
      %v446 = vld [vmem:[#allocation11 + $0x4] sm:$0xf]
      %v447 = vld [vmem:[#allocation11 + $0x8] sm:$0xf]
      %v448 = vld [vmem:[#allocation11 + $0xc] sm:$0xf]
      %v449 = vld [vmem:[#allocation11 + $0x10] sm:$0xf]
      %v450 = vld [vmem:[#allocation11 + $0x14] sm:$0xf]
      %v451 = vld [vmem:[#allocation11 + $0x18] sm:$0xf]
      %v452 = vld [vmem:[#allocation11 + $0x1c] sm:$0xf]
      %v453 = vld [vmem:[#allocation11 + $0x20] sm:$0xf]
      %v454 = vld [vmem:[#allocation11 + $0x24] sm:$0xf]
      %v455 = vld [vmem:[#allocation11 + $0x28] sm:$0xf]
      %v456 = vld [vmem:[#allocation11 + $0x2c] sm:$0xf]
      %v457 = vld [vmem:[#allocation11 + $0x30] sm:$0xf]
      %v458 = vld [vmem:[#allocation11 + $0x34] sm:$0xf]
      %v459 = vld [vmem:[#allocation11 + $0x38] sm:$0xf]
      %v460 = vld [vmem:[#allocation11 + $0x3c] sm:$0xf]
      %v477 = vunpack.c.l.b16 %v429
      %v478 = vunpack.c.l.b16 %v430
      %v479 = vunpack.c.l.b16 %v431
      %v480 = vunpack.c.l.b16 %v432
      %v481 = vunpack.c.l.b16 %v433
      %v482 = vunpack.c.l.b16 %v434
      %v483 = vunpack.c.l.b16 %v435
      %v484 = vunpack.c.l.b16 %v436
      %v485 = vunpack.c.l.b16 %v437
      %v486 = vunpack.c.l.b16 %v438
      %v487 = vunpack.c.l.b16 %v439
      %v488 = vunpack.c.l.b16 %v440
      %v489 = vunpack.c.l.b16 %v441
      %v490 = vunpack.c.l.b16 %v442
      %v491 = vunpack.c.l.b16 %v443
      %v492 = vunpack.c.l.b16 %v444
      %v493 = vpack.c.b16 %v478, %v477
      %v494 = vpack.c.b16 %v480, %v479
      %v495 = vpack.c.b16 %v482, %v481
      %v496 = vpack.c.b16 %v484, %v483
      %v497 = vpack.c.b16 %v486, %v485
      %v498 = vpack.c.b16 %v488, %v487
      %v499 = vpack.c.b16 %v490, %v489
      %v500 = vpack.c.b16 %v492, %v491
      %v525 = vunpack.c.l.b16 %v445
      %v526 = vunpack.c.l.b16 %v446
      %v527 = vunpack.c.l.b16 %v447
      %v528 = vunpack.c.l.b16 %v448
      %v529 = vunpack.c.l.b16 %v449
      %v530 = vunpack.c.l.b16 %v450
      %v531 = vunpack.c.l.b16 %v451
      %v532 = vunpack.c.l.b16 %v452
      %v533 = vunpack.c.l.b16 %v453
      %v534 = vunpack.c.l.b16 %v454
      %v535 = vunpack.c.l.b16 %v455
      %v536 = vunpack.c.l.b16 %v456
      %v537 = vunpack.c.l.b16 %v457
      %v538 = vunpack.c.l.b16 %v458
      %v539 = vunpack.c.l.b16 %v459
      %v540 = vunpack.c.l.b16 %v460
      %v541 = vpack.c.b16 %v526, %v525
      %v542 = vpack.c.b16 %v528, %v527
      %v543 = vpack.c.b16 %v530, %v529
      %v544 = vpack.c.b16 %v532, %v531
      %v545 = vpack.c.b16 %v534, %v533
      %v546 = vpack.c.b16 %v536, %v535
      %v547 = vpack.c.b16 %v538, %v537
      %v548 = vpack.c.b16 %v540, %v539
      %557 = vmatprep.subr.bf16.mxu0 0
      %558 = vmatpush1.bf16.msra.mxu0 %v548
      %559 = vmatprep.subr.bf16.mxu0 0
      %560 = vmatpush1.bf16.msra.mxu0 %v547
      %561 = vmatprep.subr.bf16.mxu0 0
      %562 = vmatpush1.bf16.msra.mxu0 %v546
      %563 = vmatprep.subr.bf16.mxu0 0
      %564 = vmatpush1.bf16.msra.mxu0 %v545
      %565 = vmatprep.subr.bf16.mxu0 0
      %566 = vmatpush1.bf16.msra.mxu0 %v544
      %567 = vmatprep.subr.bf16.mxu0 0
      %568 = vmatpush1.bf16.msra.mxu0 %v543
      %569 = vmatprep.subr.bf16.mxu0 0
      %570 = vmatpush1.bf16.msra.mxu0 %v542
      %571 = vmatprep.subr.bf16.mxu0 0
      %572 = vmatpush1.bf16.msra.mxu0 %v541
      %573 = vmatprep.subr.bf16.mxu0 0
      %574 = vmatpush2.bf16.msra.mxu0 0
      %575 = vmatprep.subr.bf16.mxu0 0
      %576 = vmatpush2.bf16.msra.mxu0 0
      %577 = vmatprep.subr.bf16.mxu0 0
      %578 = vmatpush2.bf16.msra.mxu0 0
      %579 = vmatprep.subr.bf16.mxu0 0
      %580 = vmatpush2.bf16.msra.mxu0 0
      %581 = vmatprep.subr.bf16.mxu0 0
      %582 = vmatpush2.bf16.msra.mxu0 0
      %583 = vmatprep.subr.bf16.mxu0 0
      %584 = vmatpush2.bf16.msra.mxu0 0
      %585 = vmatprep.subr.bf16.mxu0 0
      %586 = vmatpush2.bf16.msra.mxu0 0
      %587 = vmatprep.subr.bf16.mxu0 0
      %588 = vmatpush2.bf16.msra.mxu0 0
      %589 = vmatprep.mubr.bf16.mxu0 0
      %590 = vmatmul.mubr.bf16.gmra.mxu0 %v493
      %v591 = vpop.f32.mrf.mxu0
      %v592 = vadd.f32 0.0, %v591
      %v593 = vpop.f32.mrf.mxu0
      %v594 = vpop.f32.mrf.mxu0
      %v595 = vadd.f32 0.0, %v594
      %v596 = vpop.f32.mrf.mxu0
      %597 = vmatprep.mubr.bf16.mxu0 0
      %598 = vmatmul.mubr.bf16.gmra.mxu0 %v494
      %v599 = vpop.f32.mrf.mxu0
      %v600 = vadd.f32 0.0, %v599
      %v601 = vpop.f32.mrf.mxu0
      %v602 = vpop.f32.mrf.mxu0
      %v603 = vadd.f32 0.0, %v602
      %v604 = vpop.f32.mrf.mxu0
      %605 = vmatprep.mubr.bf16.mxu0 0
      %606 = vmatmul.mubr.bf16.gmra.mxu0 %v495
      %v607 = vpop.f32.mrf.mxu0
      %v608 = vadd.f32 0.0, %v607
      %v609 = vpop.f32.mrf.mxu0
      %v610 = vpop.f32.mrf.mxu0
      %v611 = vadd.f32 0.0, %v610
      %v612 = vpop.f32.mrf.mxu0
      %613 = vmatprep.mubr.bf16.mxu0 0
      %614 = vmatmul.mubr.bf16.gmra.mxu0 %v496
      %v615 = vpop.f32.mrf.mxu0
      %v616 = vadd.f32 0.0, %v615
      %v617 = vpop.f32.mrf.mxu0
      %v618 = vpop.f32.mrf.mxu0
      %v619 = vadd.f32 0.0, %v618
      %v620 = vpop.f32.mrf.mxu0
      %621 = vmatprep.mubr.bf16.mxu0 0
      %622 = vmatmul.mubr.bf16.gmra.mxu0 %v497
      %v623 = vpop.f32.mrf.mxu0
      %v624 = vadd.f32 0.0, %v623
      %v625 = vpop.f32.mrf.mxu0
      %v626 = vpop.f32.mrf.mxu0
      %v627 = vadd.f32 0.0, %v626
      %v628 = vpop.f32.mrf.mxu0
      %629 = vmatprep.mubr.bf16.mxu0 0
      %630 = vmatmul.mubr.bf16.gmra.mxu0 %v498
      %v631 = vpop.f32.mrf.mxu0
      %v632 = vadd.f32 0.0, %v631
      %v633 = vpop.f32.mrf.mxu0
      %v634 = vpop.f32.mrf.mxu0
      %v635 = vadd.f32 0.0, %v634
      %v636 = vpop.f32.mrf.mxu0
      %637 = vmatprep.mubr.bf16.mxu0 0
      %638 = vmatmul.mubr.bf16.gmra.mxu0 %v499
      %v639 = vpop.f32.mrf.mxu0
      %v640 = vadd.f32 0.0, %v639
      %v641 = vpop.f32.mrf.mxu0
      %v642 = vpop.f32.mrf.mxu0
      %v643 = vadd.f32 0.0, %v642
      %v644 = vpop.f32.mrf.mxu0
      %645 = vmatprep.mubr.bf16.mxu0 0
      %646 = vmatmul.mubr.bf16.gmra.mxu0 %v500
      %v647 = vpop.f32.mrf.mxu0
      %v648 = vadd.f32 0.0, %v647
      %v649 = vpop.f32.mrf.mxu0
      %v650 = vpop.f32.mrf.mxu0
      %v651 = vadd.f32 0.0, %v650
      %v652 = vpop.f32.mrf.mxu0
      %653 = vdwg.mxu0
      %v670 = vunpack.c.l.b16 %v413
      %v671 = vunpack.c.l.b16 %v414
      %v672 = vunpack.c.l.b16 %v415
      %v673 = vunpack.c.l.b16 %v416
      %v674 = vunpack.c.l.b16 %v417
      %v675 = vunpack.c.l.b16 %v418
      %v676 = vunpack.c.l.b16 %v419
      %v677 = vunpack.c.l.b16 %v420
      %v678 = vunpack.c.l.b16 %v421
      %v679 = vunpack.c.l.b16 %v422
      %v680 = vunpack.c.l.b16 %v423
      %v681 = vunpack.c.l.b16 %v424
      %v682 = vunpack.c.l.b16 %v425
      %v683 = vunpack.c.l.b16 %v426
      %v684 = vunpack.c.l.b16 %v427
      %v685 = vunpack.c.l.b16 %v428
      %v686 = vpack.c.b16 %v671, %v670
      %v687 = vpack.c.b16 %v673, %v672
      %v688 = vpack.c.b16 %v675, %v674
      %v689 = vpack.c.b16 %v677, %v676
      %v690 = vpack.c.b16 %v679, %v678
      %v691 = vpack.c.b16 %v681, %v680
      %v692 = vpack.c.b16 %v683, %v682
      %v693 = vpack.c.b16 %v685, %v684
      %702 = vmatprep.subr.bf16.mxu0 0
      %703 = vmatpush1.bf16.msra.mxu0 %v693
      %704 = vmatprep.subr.bf16.mxu0 0
      %705 = vmatpush1.bf16.msra.mxu0 %v692
      %706 = vmatprep.subr.bf16.mxu0 0
      %707 = vmatpush1.bf16.msra.mxu0 %v691
      %708 = vmatprep.subr.bf16.mxu0 0
      %709 = vmatpush1.bf16.msra.mxu0 %v690
      %710 = vmatprep.subr.bf16.mxu0 0
      %711 = vmatpush1.bf16.msra.mxu0 %v689
      %712 = vmatprep.subr.bf16.mxu0 0
      %713 = vmatpush1.bf16.msra.mxu0 %v688
      %714 = vmatprep.subr.bf16.mxu0 0
      %715 = vmatpush1.bf16.msra.mxu0 %v687
      %716 = vmatprep.subr.bf16.mxu0 0
      %717 = vmatpush1.bf16.msra.mxu0 %v686
      %718 = vmatprep.subr.bf16.mxu0 0
      %719 = vmatpush2.bf16.msra.mxu0 0
      %720 = vmatprep.subr.bf16.mxu0 0
      %721 = vmatpush2.bf16.msra.mxu0 0
      %722 = vmatprep.subr.bf16.mxu0 0
      %723 = vmatpush2.bf16.msra.mxu0 0
      %724 = vmatprep.subr.bf16.mxu0 0
      %725 = vmatpush2.bf16.msra.mxu0 0
      %726 = vmatprep.subr.bf16.mxu0 0
      %727 = vmatpush2.bf16.msra.mxu0 0
      %728 = vmatprep.subr.bf16.mxu0 0
      %729 = vmatpush2.bf16.msra.mxu0 0
      %730 = vmatprep.subr.bf16.mxu0 0
      %731 = vmatpush2.bf16.msra.mxu0 0
      %732 = vmatprep.subr.bf16.mxu0 0
      %733 = vmatpush2.bf16.msra.mxu0 0
      %734 = vmatprep.mubr.bf16.mxu0 0
      %735 = vmatmul.mubr.bf16.gmra.mxu0 %v405
      %v736 = vpop.f32.mrf.mxu0
      %v737 = vadd.f32 %v592, %v736
      %v738 = vpop.f32.mrf.mxu0
      %v739 = vpop.f32.mrf.mxu0
      %v740 = vadd.f32 %v595, %v739
      %v741 = vpop.f32.mrf.mxu0
      %742 = vmatprep.mubr.bf16.mxu0 0
      %743 = vmatmul.mubr.bf16.gmra.mxu0 %v406
      %v744 = vpop.f32.mrf.mxu0
      %v745 = vadd.f32 %v600, %v744
      %v746 = vpop.f32.mrf.mxu0
      %v747 = vpop.f32.mrf.mxu0
      %v748 = vadd.f32 %v603, %v747
      %v749 = vpop.f32.mrf.mxu0
      %750 = vmatprep.mubr.bf16.mxu0 0
      %751 = vmatmul.mubr.bf16.gmra.mxu0 %v407
      %v752 = vpop.f32.mrf.mxu0
      %v753 = vadd.f32 %v608, %v752
      %v754 = vpop.f32.mrf.mxu0
      %v755 = vpop.f32.mrf.mxu0
      %v756 = vadd.f32 %v611, %v755
      %v757 = vpop.f32.mrf.mxu0
      %758 = vmatprep.mubr.bf16.mxu0 0
      %759 = vmatmul.mubr.bf16.gmra.mxu0 %v408
      %v760 = vpop.f32.mrf.mxu0
      %v761 = vadd.f32 %v616, %v760
      %v762 = vpop.f32.mrf.mxu0
      %v763 = vpop.f32.mrf.mxu0
      %v764 = vadd.f32 %v619, %v763
      %v765 = vpop.f32.mrf.mxu0
      %766 = vmatprep.mubr.bf16.mxu0 0
      %767 = vmatmul.mubr.bf16.gmra.mxu0 %v409
      %v768 = vpop.f32.mrf.mxu0
      %v769 = vadd.f32 %v624, %v768
      %v770 = vpop.f32.mrf.mxu0
      %v771 = vpop.f32.mrf.mxu0
      %v772 = vadd.f32 %v627, %v771
      %v773 = vpop.f32.mrf.mxu0
      %774 = vmatprep.mubr.bf16.mxu0 0
      %775 = vmatmul.mubr.bf16.gmra.mxu0 %v410
      %v776 = vpop.f32.mrf.mxu0
      %v777 = vadd.f32 %v632, %v776
      %v778 = vpop.f32.mrf.mxu0
      %v779 = vpop.f32.mrf.mxu0
      %v780 = vadd.f32 %v635, %v779
      %v781 = vpop.f32.mrf.mxu0
      %782 = vmatprep.mubr.bf16.mxu0 0
      %783 = vmatmul.mubr.bf16.gmra.mxu0 %v411
      %v784 = vpop.f32.mrf.mxu0
      %v785 = vadd.f32 %v640, %v784
      %v786 = vpop.f32.mrf.mxu0
      %v787 = vpop.f32.mrf.mxu0
      %v788 = vadd.f32 %v643, %v787
      %v789 = vpop.f32.mrf.mxu0
      %790 = vmatprep.mubr.bf16.mxu0 0
      %791 = vmatmul.mubr.bf16.gmra.mxu0 %v412
      %v792 = vpop.f32.mrf.mxu0
      %v793 = vadd.f32 %v648, %v792
      %v794 = vpop.f32.mrf.mxu0
      %v795 = vpop.f32.mrf.mxu0
      %v796 = vadd.f32 %v651, %v795
      %v797 = vpop.f32.mrf.mxu0
      %798 = vdwg.mxu0
      %v799 = vld [vmem:[%s5] sm:$0x1]
      %v801 = vlaneseq
      %v802 = vshrl.u32 %v801, 7
      %v803 = vsub.s32 0, %v802
      %v804 = vrot.slane %v799, %v803
      %v806 = vadd.f32 %v737, %v804
      %v807 = vadd.f32 %v740, %v804
      %v808 = vadd.f32 %v745, %v804
      %v809 = vadd.f32 %v748, %v804
      %v810 = vadd.f32 %v753, %v804
      %v811 = vadd.f32 %v756, %v804
      %v812 = vadd.f32 %v761, %v804
      %v813 = vadd.f32 %v764, %v804
      %v814 = vadd.f32 %v769, %v804
      %v815 = vadd.f32 %v772, %v804
      %v816 = vadd.f32 %v777, %v804
      %v817 = vadd.f32 %v780, %v804
      %v818 = vadd.f32 %v785, %v804
      %v819 = vadd.f32 %v788, %v804
      %v820 = vadd.f32 %v793, %v804
      %v821 = vadd.f32 %v796, %v804
      %v822 = vmax.f32 %v806, 0.0
      %v823 = vmax.f32 %v807, 0.0
      %v824 = vmax.f32 %v808, 0.0
      %v825 = vmax.f32 %v809, 0.0
      %v826 = vmax.f32 %v810, 0.0
      %v827 = vmax.f32 %v811, 0.0
      %v828 = vmax.f32 %v812, 0.0
      %v829 = vmax.f32 %v813, 0.0
      %v830 = vmax.f32 %v814, 0.0
      %v831 = vmax.f32 %v815, 0.0
      %v832 = vmax.f32 %v816, 0.0
      %v833 = vmax.f32 %v817, 0.0
      %v834 = vmax.f32 %v818, 0.0
      %v835 = vmax.f32 %v819, 0.0
      %v836 = vmax.f32 %v820, 0.0
      %v837 = vmax.f32 %v821, 0.0
      %v838 = vpack.c.bf16 %v823, %v822
      %v839 = vpack.c.bf16 %v825, %v824
      %v840 = vpack.c.bf16 %v827, %v826
      %v841 = vpack.c.bf16 %v829, %v828
      %v842 = vpack.c.bf16 %v831, %v830
      %v843 = vpack.c.bf16 %v833, %v832
      %v844 = vpack.c.bf16 %v835, %v834
      %v845 = vpack.c.bf16 %v837, %v836
      %v854 = vunpack.c.l.b16 %v838
      %v855 = vunpack.c.h.b16 %v838
      %v856 = vunpack.c.l.b16 %v839
      %v857 = vunpack.c.h.b16 %v839
      %v858 = vunpack.c.l.b16 %v840
      %v859 = vunpack.c.h.b16 %v840
      %v860 = vunpack.c.l.b16 %v841
      %v861 = vunpack.c.h.b16 %v841
      %v862 = vunpack.c.l.b16 %v842
      %v863 = vunpack.c.h.b16 %v842
      %v864 = vunpack.c.l.b16 %v843
      %v865 = vunpack.c.h.b16 %v843
      %v866 = vunpack.c.l.b16 %v844
      %v867 = vunpack.c.h.b16 %v844
      %v868 = vunpack.c.l.b16 %v845
      %v869 = vunpack.c.h.b16 %v845
      %v870 = vpack.c.b16 %v854, %v854
      %v871 = vpack.c.b16 %v855, %v855
      %v872 = vpack.c.b16 %v856, %v856
      %v873 = vpack.c.b16 %v857, %v857
      %v874 = vpack.c.b16 %v858, %v858
      %v875 = vpack.c.b16 %v859, %v859
      %v876 = vpack.c.b16 %v860, %v860
      %v877 = vpack.c.b16 %v861, %v861
      %v878 = vpack.c.b16 %v862, %v862
      %v879 = vpack.c.b16 %v863, %v863
      %v880 = vpack.c.b16 %v864, %v864
      %v881 = vpack.c.b16 %v865, %v865
      %v882 = vpack.c.b16 %v866, %v866
      %v883 = vpack.c.b16 %v867, %v867
      %v884 = vpack.c.b16 %v868, %v868
      %v885 = vpack.c.b16 %v869, %v869
      %902 = vst [vmem:[#allocation12] sm:$0xf] %v870
      %903 = vst [vmem:[#allocation12 + $0x4] sm:$0xf] %v871
      %904 = vst [vmem:[#allocation12 + $0x8] sm:$0xf] %v872
      %905 = vst [vmem:[#allocation12 + $0xc] sm:$0xf] %v873
      %906 = vst [vmem:[#allocation12 + $0x10] sm:$0xf] %v874
      %907 = vst [vmem:[#allocation12 + $0x14] sm:$0xf] %v875
      %908 = vst [vmem:[#allocation12 + $0x18] sm:$0xf] %v876
      %909 = vst [vmem:[#allocation12 + $0x1c] sm:$0xf] %v877
      %910 = vst [vmem:[#allocation12 + $0x20] sm:$0xf] %v878
      %911 = vst [vmem:[#allocation12 + $0x24] sm:$0xf] %v879
      %912 = vst [vmem:[#allocation12 + $0x28] sm:$0xf] %v880
      %913 = vst [vmem:[#allocation12 + $0x2c] sm:$0xf] %v881
      %914 = vst [vmem:[#allocation12 + $0x30] sm:$0xf] %v882
      %915 = vst [vmem:[#allocation12 + $0x34] sm:$0xf] %v883
      %916 = vst [vmem:[#allocation12 + $0x38] sm:$0xf] %v884
      %917 = vst [vmem:[#allocation12 + $0x3c] sm:$0xf] %v885
    $region53: #{tpu_custom_call.1} parent=1 // pred_fallthru
      _
    // Predicated region
    $region54: #{tpu_custom_call.1} parent=1 // pred_check
      _
    $region55: #{tpu_custom_call.1} parent=1 // pred_check_branch
      %919 = sbr.rel (0) target = $region57
    $region56: #{tpu_custom_call.1} parent=1 // pred_region
      %s921 = ssub.s32 1024, 1024
      %922 = vsyncadd [#allocation5], %s921
      %s923 = sshll.u32 [#allocation12], 4
      %s924 = int_to_ptr.vmem [resolvable:$true] %s923
      %929 = dma.vmem_to_hbm [thread:$0]  %s924, 1024, %s6, [#allocation5], 64, 64, 4
    $region57: #{tpu_custom_call.1} parent=1 // pred_fallthru
      _
    // Predicated region
    $region58: #{tpu_custom_call.1} parent=1 // pred_check
      _
    $region59: #{tpu_custom_call.1} parent=1 // pred_check_branch
      %931 = sbr.rel (0) target = $region61
    $region60: #{tpu_custom_call.1} parent=1 // pred_region
      %932 = dma.done [#allocation5], 1024
    $region61: #{tpu_custom_call.1} parent=1 // pred_fallthru
      _
    %933 = vsyncpa [#allocation4], 1
    %934 = vsyncpa [#allocation7], 1
    %935 = vsyncpa [#allocation10], 1
    %936 = vsyncpa [#allocation5], 1

</llo_original>
